<compile_context>
chip_gen: v5e
topology: v5e:2x2
jax: 0.10.0
libtpu: 0.0.40
codegen_flags: <defaults>
</compile_context>

<pallas_src>
import functools

import jax
import jax.numpy as jnp
from jax.experimental import pallas as pl
from jax.experimental.pallas import tpu as pltpu


def actor_kernel(x_ref, w1_ref, b1_ref, w2_ref, b2_ref, w3_ref, b3_ref,
                 o_ref, *, max_action):
    """One batch tile of the forward pass: 3 matmuls + relu/relu/tanh."""
    x = x_ref[...]

    # Layer 1: relu(x @ W1 + b1)
    h1 = jnp.dot(x, w1_ref[...], preferred_element_type=jnp.float32)
    h1 = jnp.maximum(h1 + b1_ref[...], 0.0)

    # Layer 2: relu(h1 @ W2 + b2)
    h2 = jnp.dot(h1, w2_ref[...], preferred_element_type=jnp.float32)
    h2 = jnp.maximum(h2 + b2_ref[...], 0.0)

    # Layer 3: max_action * tanh(h2 @ W3 + b3)   (W3/b3 zero-padded to 128 lanes)
    a = jnp.dot(h2, w3_ref[...], preferred_element_type=jnp.float32)
    a = a + b3_ref[...]
    o_ref[...] = (max_action * jnp.tanh(a)).astype(o_ref.dtype)


def _round_up(x, m):
    return ((x + m - 1) // m) * m


def actor_forward(state, params, max_action, *, block_b=256):
    """state: [B, state_dim] f32. params: dict of W1,b1,W2,b2,W3,b3 (W: in x out)."""
    w1, b1 = params["W1"], params["b1"]
    w2, b2 = params["W2"], params["b2"]
    w3, b3 = params["W3"], params["b3"]

    B, state_dim = state.shape
    hidden_dim = w1.shape[1]
    action_dim = w3.shape[1]

    # ---- Lane-dense output: pad final layer's output width to a multiple of 128.
    out_pad = _round_up(max(action_dim, 128), 128)
    if out_pad != action_dim:
        w3p = jnp.zeros((hidden_dim, out_pad), w3.dtype).at[:, :action_dim].set(w3)
        b3p = jnp.zeros((1, out_pad), b3.dtype).at[:, :action_dim].set(b3)
    else:
        w3p, b3p = w3, b3

    # ---- Batch tiling: TB multiple of 8 (f32 sublanes); pad B to a multiple of TB.
    tb = min(block_b, _round_up(B, 8))
    tb = max(8, _round_up(tb, 8))
    Bp = _round_up(B, tb)
    if Bp != B:
        state_p = jnp.zeros((Bp, state_dim), state.dtype).at[:B, :].set(state)
    else:
        state_p = state

    grid = (pl.cdiv(Bp, tb),)

    # Weights/biases are grid-invariant (stay resident in VMEM across steps).
    invariant = lambda arr: pl.BlockSpec(arr.shape, lambda i: (0,) * arr.ndim)

    kernel = functools.partial(actor_kernel, max_action=float(max_action))
    out_padded = pl.pallas_call(
        kernel,
        out_shape=jax.ShapeDtypeStruct((Bp, out_pad), jnp.float32),
        grid=grid,
        in_specs=[
            pl.BlockSpec((tb, state_dim), lambda i: (i, 0)),  # state tile
            invariant(w1), invariant(b1),
            invariant(w2), invariant(b2),
            invariant(w3p), invariant(b3p),
        ],
        out_specs=pl.BlockSpec((tb, out_pad), lambda i: (i, 0)),
        compiler_params=pltpu.CompilerParams(
            dimension_semantics=("parallel",),
        ),
    )(state_p, w1, b1, w2, b2, w3p, b3p)

    # Drop batch padding and the zero-padded action lanes.
    return out_padded[:B, :action_dim]


def init_params(key, state_dim, action_dim, hidden_dim):
    """Deterministic init mirroring nn.Linear's U(-1/sqrt(fan_in), 1/sqrt(fan_in))."""
    ks = jax.random.split(key, 6)

    def linear(kw, kb, fan_in, fan_out):
        bound = 1.0 / jnp.sqrt(fan_in)
        W = jax.random.uniform(kw, (fan_in, fan_out), jnp.float32, -bound, bound)
        b = jax.random.uniform(kb, (1, fan_out), jnp.float32, -bound, bound)
        return W, b

    W1, b1 = linear(ks[0], ks[1], state_dim, hidden_dim)
    W2, b2 = linear(ks[2], ks[3], hidden_dim, hidden_dim)
    W3, b3 = linear(ks[4], ks[5], hidden_dim, action_dim)
    return {"W1": W1, "b1": b1, "W2": W2, "b2": b2, "W3": W3, "b3": b3}


def actor_ref(state, params, max_action):
    """Pure-JAX reference matching the PyTorch forward."""
    h = jax.nn.relu(state @ params["W1"] + params["b1"])
    h = jax.nn.relu(h @ params["W2"] + params["b2"])
    return max_action * jnp.tanh(h @ params["W3"] + params["b3"])


if __name__ == "__main__":
    # Small shapes consistent with the module: Actor(state_dim, action_dim, max_action).
    # batch deliberately NOT a multiple of the block size to exercise batch padding,
    # and block_b chosen so the grid has >1 step (pipelined state loads / output stores).
    batch, state_dim, action_dim, hidden_dim = 48, 16, 8, 32
    max_action = 2.0

    key = jax.random.PRNGKey(0)
    k_params, k_state = jax.random.split(key)
    params = init_params(k_params, state_dim, action_dim, hidden_dim)
    state = jax.random.normal(k_state, (batch, state_dim), jnp.float32)

    out = actor_forward(state, params, max_action, block_b=32)
    out = jax.block_until_ready(out)

    ref = actor_ref(state, params, max_action)
    assert out.shape == (batch, action_dim), out.shape
    assert jnp.allclose(out, ref, atol=1e-5, rtol=1e-5), "mismatch vs reference"

    print("KERNEL_OK")
</pallas_src>

<mosaic_0001>
module attributes {stable_mosaic.version = 11 : i64} {
  func.func @actor_kernel(%arg0: i32, %arg1: memref<32x16xf32, #tpu.memory_space<vmem>>, %arg2: memref<16x32xf32, #tpu.memory_space<vmem>>, %arg3: memref<1x32xf32, #tpu.memory_space<vmem>>, %arg4: memref<32x32xf32, #tpu.memory_space<vmem>>, %arg5: memref<1x32xf32, #tpu.memory_space<vmem>>, %arg6: memref<32x128xf32, #tpu.memory_space<vmem>>, %arg7: memref<1x128xf32, #tpu.memory_space<vmem>>, %arg8: memref<32x128xf32, #tpu.memory_space<vmem>>) attributes {dimension_semantics = [#tpu.dimension_semantics<parallel>], iteration_bounds = array<i64: 2>, scalar_prefetch = 0 : i64, scratch_operands = 0 : i64, tpu.core_type = #tpu.core_type<tc>, window_params = [{transform_indices = @transform_0, window_bounds = array<i64: 32, 16>}, {pipeline_mode = #tpu.pipeline_mode<synchronous>, transform_indices = @transform_1, window_bounds = array<i64: 16, 32>}, {pipeline_mode = #tpu.pipeline_mode<synchronous>, transform_indices = @transform_2, window_bounds = array<i64: 1, 32>}, {pipeline_mode = #tpu.pipeline_mode<synchronous>, transform_indices = @transform_3, window_bounds = array<i64: 32, 32>}, {pipeline_mode = #tpu.pipeline_mode<synchronous>, transform_indices = @transform_4, window_bounds = array<i64: 1, 32>}, {pipeline_mode = #tpu.pipeline_mode<synchronous>, transform_indices = @transform_5, window_bounds = array<i64: 32, 128>}, {pipeline_mode = #tpu.pipeline_mode<synchronous>, transform_indices = @transform_6, window_bounds = array<i64: 1, 128>}, {transform_indices = @transform_7, window_bounds = array<i64: 32, 128>}]} {
    %c0 = arith.constant 0 : index
    %c0_0 = arith.constant 0 : index
    %0 = vector.load %arg1[%c0, %c0_0] : memref<32x16xf32, #tpu.memory_space<vmem>>, vector<32x16xf32>
    %c0_1 = arith.constant 0 : index
    %c0_2 = arith.constant 0 : index
    %1 = vector.load %arg2[%c0_1, %c0_2] : memref<16x32xf32, #tpu.memory_space<vmem>>, vector<16x32xf32>
    %cst = arith.constant dense<0.000000e+00> : vector<32x32xf32>
    %2 = tpu.matmul %0, %1, %cst {dimension_numbers = #tpu.dot_dimension_numbers<[1], [0], [0], [1], [0, 0, 1, 1], [], []>} : vector<32x16xf32>, vector<16x32xf32>, vector<32x32xf32> -> vector<32x32xf32>
    %c0_3 = arith.constant 0 : index
    %c0_4 = arith.constant 0 : index
    %3 = vector.load %arg3[%c0_3, %c0_4] : memref<1x32xf32, #tpu.memory_space<vmem>>, vector<1x32xf32>
    %4 = vector.broadcast %3 : vector<1x32xf32> to vector<32x32xf32>
    %5 = arith.addf %2, %4 : vector<32x32xf32>
    %cst_5 = arith.constant 0.000000e+00 : f32
    %6 = vector.broadcast %cst_5 : f32 to vector<32x32xf32>
    %7 = arith.maximumf %5, %6 : vector<32x32xf32>
    %c0_6 = arith.constant 0 : index
    %c0_7 = arith.constant 0 : index
    %8 = vector.load %arg4[%c0_6, %c0_7] : memref<32x32xf32, #tpu.memory_space<vmem>>, vector<32x32xf32>
    %cst_8 = arith.constant dense<0.000000e+00> : vector<32x32xf32>
    %9 = tpu.matmul %7, %8, %cst_8 {dimension_numbers = #tpu.dot_dimension_numbers<[1], [0], [0], [1], [0, 0, 1, 1], [], []>} : vector<32x32xf32>, vector<32x32xf32>, vector<32x32xf32> -> vector<32x32xf32>
    %c0_9 = arith.constant 0 : index
    %c0_10 = arith.constant 0 : index
    %10 = vector.load %arg5[%c0_9, %c0_10] : memref<1x32xf32, #tpu.memory_space<vmem>>, vector<1x32xf32>
    %11 = vector.broadcast %10 : vector<1x32xf32> to vector<32x32xf32>
    %12 = arith.addf %9, %11 : vector<32x32xf32>
    %cst_11 = arith.constant 0.000000e+00 : f32
    %13 = vector.broadcast %cst_11 : f32 to vector<32x32xf32>
    %14 = arith.maximumf %12, %13 : vector<32x32xf32>
    %c0_12 = arith.constant 0 : index
    %c0_13 = arith.constant 0 : index
    %15 = vector.load %arg6[%c0_12, %c0_13] : memref<32x128xf32, #tpu.memory_space<vmem>>, vector<32x128xf32>
    %cst_14 = arith.constant dense<0.000000e+00> : vector<32x128xf32>
    %16 = tpu.matmul %14, %15, %cst_14 {dimension_numbers = #tpu.dot_dimension_numbers<[1], [0], [0], [1], [0, 0, 1, 1], [], []>} : vector<32x32xf32>, vector<32x128xf32>, vector<32x128xf32> -> vector<32x128xf32>
    %c0_15 = arith.constant 0 : index
    %c0_16 = arith.constant 0 : index
    %17 = vector.load %arg7[%c0_15, %c0_16] : memref<1x128xf32, #tpu.memory_space<vmem>>, vector<1x128xf32>
    %18 = vector.broadcast %17 : vector<1x128xf32> to vector<32x128xf32>
    %19 = arith.addf %16, %18 : vector<32x128xf32>
    %20 = math.tanh %19 : vector<32x128xf32>
    %cst_17 = arith.constant 2.000000e+00 : f32
    %21 = vector.broadcast %cst_17 : f32 to vector<32x128xf32>
    %22 = arith.mulf %21, %20 : vector<32x128xf32>
    %c0_18 = arith.constant 0 : index
    %c0_19 = arith.constant 0 : index
    %23 = vector.load %arg8[%c0_18, %c0_19] : memref<32x128xf32, #tpu.memory_space<vmem>>, vector<32x128xf32>
    tpu.vector_store %arg8[%c0_18, %c0_19], %22 {strides = array<i32>} : memref<32x128xf32, #tpu.memory_space<vmem>>, vector<32x128xf32>,
    return
  }
  func.func @transform_0(%arg0: i32) -> (i32, i32) {
    %c0_i32 = arith.constant 0 : i32
    %c0_i32_0 = arith.constant 0 : i32
    return %arg0, %c0_i32 : i32, i32
  }
  func.func @transform_1(%arg0: i32) -> (i32, i32) {
    %c0_i32 = arith.constant 0 : i32
    %c0_i32_0 = arith.constant 0 : i32
    %c0_i32_1 = arith.constant 0 : i32
    return %c0_i32, %c0_i32_0 : i32, i32
  }
  func.func @transform_2(%arg0: i32) -> (i32, i32) {
    %c0_i32 = arith.constant 0 : i32
    %c0_i32_0 = arith.constant 0 : i32
    %c0_i32_1 = arith.constant 0 : i32
    return %c0_i32, %c0_i32_0 : i32, i32
  }
  func.func @transform_3(%arg0: i32) -> (i32, i32) {
    %c0_i32 = arith.constant 0 : i32
    %c0_i32_0 = arith.constant 0 : i32
    %c0_i32_1 = arith.constant 0 : i32
    return %c0_i32, %c0_i32_0 : i32, i32
  }
  func.func @transform_4(%arg0: i32) -> (i32, i32) {
    %c0_i32 = arith.constant 0 : i32
    %c0_i32_0 = arith.constant 0 : i32
    %c0_i32_1 = arith.constant 0 : i32
    return %c0_i32, %c0_i32_0 : i32, i32
  }
  func.func @transform_5(%arg0: i32) -> (i32, i32) {
    %c0_i32 = arith.constant 0 : i32
    %c0_i32_0 = arith.constant 0 : i32
    %c0_i32_1 = arith.constant 0 : i32
    return %c0_i32, %c0_i32_0 : i32, i32
  }
  func.func @transform_6(%arg0: i32) -> (i32, i32) {
    %c0_i32 = arith.constant 0 : i32
    %c0_i32_0 = arith.constant 0 : i32
    %c0_i32_1 = arith.constant 0 : i32
    return %c0_i32, %c0_i32_0 : i32, i32
  }
  func.func @transform_7(%arg0: i32) -> (i32, i32) {
    %c0_i32 = arith.constant 0 : i32
    %c0_i32_0 = arith.constant 0 : i32
    return %arg0, %c0_i32 : i32, i32
  }
}

</mosaic_0001>

<llo_original>
// kernel: tpu_custom_call.1
$region0: #{tpu_custom_call.1}
  #allocation0 [shape = 'u32[]', space=smem, size = 0x4, offset = 0x4, fixed_abs, tag = 'smem constant byte address 0x4 - core index']
  #allocation1 [shape = 'u32[72,128]{1,0:T(1,128)}', space=vmem, size = 0x9000, scoped, tag = 'internal scratch']
  %s0 = inlined_call_operand.vmem [shape: f32[64,16], index: 0, kind: input, shape index: {}]
  %s1 = inlined_call_operand.vmem [shape: f32[16,32], index: 1, kind: input, shape index: {}]
  %s2 = inlined_call_operand.vmem [shape: f32[1,32], index: 2, kind: input, shape index: {}]
  %s3 = inlined_call_operand.vmem [shape: f32[32,32], index: 3, kind: input, shape index: {}]
  %s4 = inlined_call_operand.vmem [shape: f32[1,32], index: 4, kind: input, shape index: {}]
  %s5 = inlined_call_operand.vmem [shape: f32[32,128], index: 5, kind: input, shape index: {}]
  %s6 = inlined_call_operand.vmem [shape: f32[1,128], index: 6, kind: input, shape index: {}]
  %s7 = inlined_call_operand.hbm [shape: f32[64,128], index: 7, kind: output, shape index: {}]
  %s8 = sld [smem:[#allocation0]]
  $region61: #{tpu_custom_call.1} parent=0
    _
  %s10 = ssub.s32 1, %s8
  %s11 = scalar_select 0, %s10, %s8
  $region1: #{tpu_custom_call.1} parent=0
    #allocation2 [shape = 'u8[32768]{0}', space=vmem, size = 0x8000, scoped, tag = 'output window, operand 0']
    #allocation3 [shape = 's32[2]{0}', space=sflag, size = 0x8, scoped, tag = 'scoped memory for tpu_custom_call.1']
    %12 = vsyncpa [#allocation3], 0
    %s13 = scalar_lea.sflag [#allocation3], 1
    %14 = vsyncpa %s13, 0
    loop: start=0, step=1, limit=4
    $region2: #{tpu_custom_call.1} parent=1 // loop_pre_header
      _
    $region3: #{tpu_custom_call.1} parent=1 // loop_header
      %s16 = sphi 0, %s20
      %p17 = scmp.ge.s32.totalorder %s16, 4
      %s26 = sphi 0, %s28
      %s29 = sphi 0, %s26
      %s30 = sphi 0, %s29
      %s46 = sphi 0, %s30
      %s50 = sphi 0, %s50
      %s52 = sphi 0, %s50
      %s53 = sphi 0, %s52
      %s67 = sphi 0, %s53
      %s71 = sphi 0, %s71
      %s73 = sphi 0, %s71
      %s74 = sphi 0, %s73
      %s88 = sphi 0, %s74
      %s92 = sphi 0, %s92
      %s94 = sphi 0, %s92
      %s95 = sphi 0, %s94
      %s109 = sphi 0, %s95
      %s113 = sphi 0, %s113
      %s115 = sphi 0, %s113
      %s116 = sphi 0, %s115
      %s130 = sphi 0, %s116
      %s134 = sphi 0, %s134
      %s136 = sphi 0, %s134
      %s137 = sphi 0, %s136
      %s151 = sphi 0, %s137
      %s155 = sphi 0, %s155
      %s157 = sphi 0, %s155
      %s158 = sphi 0, %s157
      %s172 = sphi 0, %s158
      %s178 = sphi 0, %s180
      %s181 = sphi 0, %s178
      %s182 = sphi 0, %s181
      %s198 = sphi 0, %s182
    $region4: #{tpu_custom_call.1} parent=1 // loop_header_branch
      %19 = sbr.rel (%p17) target = $region8
    $region5: #{tpu_custom_call.1} parent=1 // loop_body
      %s21 = ssub.s32 %s16, 1
      %s22 = ssub.s32 %s16, 2
      %s23 = sadd.s32 %s16, 1
      %s24 = ssub.s32 %s16, %s23
      %p25 = scmp.eq.s32.totalorder %s24, 0
      %s27 = sadd.s32 %s26, 1
      %s28 = scalar_select %p25, %s26, %s27
      %p31 = pneg %p25
      %p32 = scmp.eq.s32.totalorder %s16, 1
      %p33 = por %p31, %p32
      %p34 = scmp.ne.s32.totalorder %s26, %s29
      %p35 = scmp.eq.s32.totalorder %s16, 0
      %p36 = por %p34, %p35
      %p37 = scmp.ne.s32.totalorder %s26, %s29
      %p38 = scmp.eq.s32.totalorder %s21, 1
      %p39 = por %p37, %p38
      %p40 = scmp.ne.s32.totalorder %s29, %s30
      %p41 = scmp.eq.s32.totalorder %s21, 0
      %p42 = por %p40, %p41
      %p43 = scmp.ne.s32.totalorder %s29, %s30
      %p44 = scmp.eq.s32.totalorder %s22, 1
      %p45 = por %p43, %p44
      %p47 = scmp.ne.s32.totalorder %s30, %s46
      %p48 = scmp.eq.s32.totalorder %s22, 0
      %p49 = por %p47, %p48
      %s51 = sadd.s32 %s50, 1
      %p54 = scmp.eq.s32.totalorder %s16, 1
      %p55 = scmp.ne.s32.totalorder %s50, %s52
      %p56 = scmp.eq.s32.totalorder %s16, 0
      %p57 = por %p55, %p56
      %p58 = scmp.ne.s32.totalorder %s50, %s52
      %p59 = scmp.eq.s32.totalorder %s21, 1
      %p60 = por %p58, %p59
      %p61 = scmp.ne.s32.totalorder %s52, %s53
      %p62 = scmp.eq.s32.totalorder %s21, 0
      %p63 = por %p61, %p62
      %p64 = scmp.ne.s32.totalorder %s52, %s53
      %p65 = scmp.eq.s32.totalorder %s22, 1
      %p66 = por %p64, %p65
      %p68 = scmp.ne.s32.totalorder %s53, %s67
      %p69 = scmp.eq.s32.totalorder %s22, 0
      %p70 = por %p68, %p69
      %s72 = sadd.s32 %s71, 1
      %p75 = scmp.eq.s32.totalorder %s16, 1
      %p76 = scmp.ne.s32.totalorder %s71, %s73
      %p77 = scmp.eq.s32.totalorder %s16, 0
      %p78 = por %p76, %p77
      %p79 = scmp.ne.s32.totalorder %s71, %s73
      %p80 = scmp.eq.s32.totalorder %s21, 1
      %p81 = por %p79, %p80
      %p82 = scmp.ne.s32.totalorder %s73, %s74
      %p83 = scmp.eq.s32.totalorder %s21, 0
      %p84 = por %p82, %p83
      %p85 = scmp.ne.s32.totalorder %s73, %s74
      %p86 = scmp.eq.s32.totalorder %s22, 1
      %p87 = por %p85, %p86
      %p89 = scmp.ne.s32.totalorder %s74, %s88
      %p90 = scmp.eq.s32.totalorder %s22, 0
      %p91 = por %p89, %p90
      %s93 = sadd.s32 %s92, 1
      %p96 = scmp.eq.s32.totalorder %s16, 1
      %p97 = scmp.ne.s32.totalorder %s92, %s94
      %p98 = scmp.eq.s32.totalorder %s16, 0
      %p99 = por %p97, %p98
      %p100 = scmp.ne.s32.totalorder %s92, %s94
      %p101 = scmp.eq.s32.totalorder %s21, 1
      %p102 = por %p100, %p101
      %p103 = scmp.ne.s32.totalorder %s94, %s95
      %p104 = scmp.eq.s32.totalorder %s21, 0
      %p105 = por %p103, %p104
      %p106 = scmp.ne.s32.totalorder %s94, %s95
      %p107 = scmp.eq.s32.totalorder %s22, 1
      %p108 = por %p106, %p107
      %p110 = scmp.ne.s32.totalorder %s95, %s109
      %p111 = scmp.eq.s32.totalorder %s22, 0
      %p112 = por %p110, %p111
      %s114 = sadd.s32 %s113, 1
      %p117 = scmp.eq.s32.totalorder %s16, 1
      %p118 = scmp.ne.s32.totalorder %s113, %s115
      %p119 = scmp.eq.s32.totalorder %s16, 0
      %p120 = por %p118, %p119
      %p121 = scmp.ne.s32.totalorder %s113, %s115
      %p122 = scmp.eq.s32.totalorder %s21, 1
      %p123 = por %p121, %p122
      %p124 = scmp.ne.s32.totalorder %s115, %s116
      %p125 = scmp.eq.s32.totalorder %s21, 0
      %p126 = por %p124, %p125
      %p127 = scmp.ne.s32.totalorder %s115, %s116
      %p128 = scmp.eq.s32.totalorder %s22, 1
      %p129 = por %p127, %p128
      %p131 = scmp.ne.s32.totalorder %s116, %s130
      %p132 = scmp.eq.s32.totalorder %s22, 0
      %p133 = por %p131, %p132
      %s135 = sadd.s32 %s134, 1
      %p138 = scmp.eq.s32.totalorder %s16, 1
      %p139 = scmp.ne.s32.totalorder %s134, %s136
      %p140 = scmp.eq.s32.totalorder %s16, 0
      %p141 = por %p139, %p140
      %p142 = scmp.ne.s32.totalorder %s134, %s136
      %p143 = scmp.eq.s32.totalorder %s21, 1
      %p144 = por %p142, %p143
      %p145 = scmp.ne.s32.totalorder %s136, %s137
      %p146 = scmp.eq.s32.totalorder %s21, 0
      %p147 = por %p145, %p146
      %p148 = scmp.ne.s32.totalorder %s136, %s137
      %p149 = scmp.eq.s32.totalorder %s22, 1
      %p150 = por %p148, %p149
      %p152 = scmp.ne.s32.totalorder %s137, %s151
      %p153 = scmp.eq.s32.totalorder %s22, 0
      %p154 = por %p152, %p153
      %s156 = sadd.s32 %s155, 1
      %p159 = scmp.eq.s32.totalorder %s16, 1
      %p160 = scmp.ne.s32.totalorder %s155, %s157
      %p161 = scmp.eq.s32.totalorder %s16, 0
      %p162 = por %p160, %p161
      %p163 = scmp.ne.s32.totalorder %s155, %s157
      %p164 = scmp.eq.s32.totalorder %s21, 1
      %p165 = por %p163, %p164
      %p166 = scmp.ne.s32.totalorder %s157, %s158
      %p167 = scmp.eq.s32.totalorder %s21, 0
      %p168 = por %p166, %p167
      %p169 = scmp.ne.s32.totalorder %s157, %s158
      %p170 = scmp.eq.s32.totalorder %s22, 1
      %p171 = por %p169, %p170
      %p173 = scmp.ne.s32.totalorder %s158, %s172
      %p174 = scmp.eq.s32.totalorder %s22, 0
      %p175 = por %p173, %p174
      %s176 = ssub.s32 %s16, %s23
      %p177 = scmp.eq.s32.totalorder %s176, 0
      %s179 = sadd.s32 %s178, 1
      %s180 = scalar_select %p177, %s178, %s179
      %p183 = pneg %p177
      %p184 = scmp.eq.s32.totalorder %s16, 1
      %p185 = por %p183, %p184
      %p186 = scmp.ne.s32.totalorder %s178, %s181
      %p187 = scmp.eq.s32.totalorder %s16, 0
      %p188 = por %p186, %p187
      %p189 = scmp.ne.s32.totalorder %s178, %s181
      %p190 = scmp.eq.s32.totalorder %s21, 1
      %p191 = por %p189, %p190
      %p192 = scmp.ne.s32.totalorder %s181, %s182
      %p193 = scmp.eq.s32.totalorder %s21, 0
      %p194 = por %p192, %p193
      %p195 = scmp.ne.s32.totalorder %s181, %s182
      %p196 = scmp.eq.s32.totalorder %s22, 1
      %p197 = por %p195, %p196
      %p199 = scmp.ne.s32.totalorder %s182, %s198
      %p200 = scmp.eq.s32.totalorder %s22, 0
      %p201 = por %p199, %p200
      %p202 = scmp.le.s32.totalorder 1, %s16
      %p203 = scmp.lt.s32.totalorder %s16, 3
      %p204 = pnand %p202, %p203
      %p205 = pneg %p204
      // Predicated region
      $region9: #{tpu_custom_call.1} parent=5 // pred_check
        _
      $region10: #{tpu_custom_call.1} parent=5 // pred_check_branch
        %207 = sbr.rel (%p204) target = $region12
      $region11: #{tpu_custom_call.1} parent=5 // pred_region
        %s208 = ssub.s32 %s16, 1
        // Predicated region
        $region13: #{tpu_custom_call.1} parent=11 // pred_check
          %p209 = pneg %p63
        $region14: #{tpu_custom_call.1} parent=11 // pred_check_branch
          %211 = sbr.rel (%p209) target = $region16
        $region15: #{tpu_custom_call.1} parent=11 // pred_region
          _
        $region16: #{tpu_custom_call.1} parent=11 // pred_fallthru
          _
        // Predicated region
        $region17: #{tpu_custom_call.1} parent=11 // pred_check
          %p212 = pneg %p84
        $region18: #{tpu_custom_call.1} parent=11 // pred_check_branch
          %214 = sbr.rel (%p212) target = $region20
        $region19: #{tpu_custom_call.1} parent=11 // pred_region
          _
        $region20: #{tpu_custom_call.1} parent=11 // pred_fallthru
          _
        // Predicated region
        $region21: #{tpu_custom_call.1} parent=11 // pred_check
          %p215 = pneg %p105
        $region22: #{tpu_custom_call.1} parent=11 // pred_check_branch
          %217 = sbr.rel (%p215) target = $region24
        $region23: #{tpu_custom_call.1} parent=11 // pred_region
          _
        $region24: #{tpu_custom_call.1} parent=11 // pred_fallthru
          _
        // Predicated region
        $region25: #{tpu_custom_call.1} parent=11 // pred_check
          %p218 = pneg %p126
        $region26: #{tpu_custom_call.1} parent=11 // pred_check_branch
          %220 = sbr.rel (%p218) target = $region28
        $region27: #{tpu_custom_call.1} parent=11 // pred_region
          _
        $region28: #{tpu_custom_call.1} parent=11 // pred_fallthru
          _
        // Predicated region
        $region29: #{tpu_custom_call.1} parent=11 // pred_check
          %p221 = pneg %p147
        $region30: #{tpu_custom_call.1} parent=11 // pred_check_branch
          %223 = sbr.rel (%p221) target = $region32
        $region31: #{tpu_custom_call.1} parent=11 // pred_region
          _
        $region32: #{tpu_custom_call.1} parent=11 // pred_fallthru
          _
        // Predicated region
        $region33: #{tpu_custom_call.1} parent=11 // pred_check
          %p224 = pneg %p168
        $region34: #{tpu_custom_call.1} parent=11 // pred_check_branch
          %226 = sbr.rel (%p224) target = $region36
        $region35: #{tpu_custom_call.1} parent=11 // pred_region
          _
        $region36: #{tpu_custom_call.1} parent=11 // pred_fallthru
          _
      $region12: #{tpu_custom_call.1} parent=5 // pred_fallthru
        _
      %p227 = scmp.lt.s32.totalorder %s16, 2
      // Predicated region
      $region37: #{tpu_custom_call.1} parent=5 // pred_check
        %p228 = pneg %p227
      $region38: #{tpu_custom_call.1} parent=5 // pred_check_branch
        %230 = sbr.rel (%p228) target = $region40
      $region39: #{tpu_custom_call.1} parent=5 // pred_region
        // Predicated region
        $region41: #{tpu_custom_call.1} parent=39 // pred_check
          %p231 = pneg %p36
        $region42: #{tpu_custom_call.1} parent=39 // pred_check_branch
          %233 = sbr.rel (%p231) target = $region44
        $region43: #{tpu_custom_call.1} parent=39 // pred_region
          %s234 = smul.u32 4, %s16
          %p235 = scmp.lt.s32.totalorder %s234, 7
          %s236 = scalar_select %p235, %s234, 7
          %s237 = smul.addr %s236, 8
          %s238 = scalar_lea.vmem %s0, %s237
          %s239 = smul.u32 4, %s16
        $region44: #{tpu_custom_call.1} parent=39 // pred_fallthru
          _
      $region40: #{tpu_custom_call.1} parent=5 // pred_fallthru
        _
      %p240 = scmp.le.s32.totalorder 1, %s16
      %p241 = scmp.lt.s32.totalorder %s16, 3
      %p242 = pnand %p240, %p241
      %p243 = pneg %p242
      // Predicated region
      $region45: #{tpu_custom_call.1} parent=5 // pred_check
        _
      $region46: #{tpu_custom_call.1} parent=5 // pred_check_branch
        %245 = sbr.rel (%p242) target = $region48
      $region47: #{tpu_custom_call.1} parent=5 // pred_region
        %s246 = ssub.s32 %s16, 1
        %s247 = smul.u32 4, %s21
        %p248 = scmp.lt.s32.totalorder %s247, 7
        %s249 = scalar_select %p248, %s247, 7
        %s250 = smul.addr %s249, 8
        %s251 = scalar_lea.vmem %s0, %s250
        %p252 = pneg %p42
        %p253 = pneg %p39
        %p254 = pneg %p63
        %p255 = pneg %p60
        %p256 = pneg %p84
        %p257 = pneg %p81
        %p258 = pneg %p105
        %p259 = pneg %p102
        %p260 = pneg %p126
        %p261 = pneg %p123
        %p262 = pneg %p147
        %p263 = pneg %p144
        %p264 = pneg %p168
        %p265 = pneg %p165
        %p266 = pneg %p194
        %p267 = pneg %p191
        %s268 = sand.u32 %s181, 1
        %s269 = scalar_lea.sflag [#allocation3], %s268
        %s270 = sand.u32 %s181, 1
        %s271 = smul.addr %s270, 32
        %s272 = scalar_lea.vmem [#allocation2], %s271
        %s273 = smul.u32 4, %s21
        %p274 = scmp.lt.s32.totalorder %s273, 7
        %s275 = scalar_select %p274, %s273, 7
        %s276 = smul.addr %s275, 8
        %s277 = scalar_lea.vmem %s0, %s276
        %s278 = smul.u32 4, %s21
        %s279 = smul.u32 4, %s21
        %v280 = vld [vmem:[%s277] sm:$0xff]
        %v281 = vld [vmem:[%s277 + $0x8] sm:$0xff]
        %v282 = vld [vmem:[%s277 + $0x10] sm:$0xff]
        %v283 = vld [vmem:[%s277 + $0x18] sm:$0xff]
        %v284 = vld [vmem:[%s1] sm:$0xff]
        %v285 = vld [vmem:[%s1 + $0x8] sm:$0xff]
        %v286 = vld [vmem:[%s2] sm:$0x1]
        %v288 = vperm.slane %v286, 0
        %vm290 = vcmask 130048
        %v292 = vsel %vm290, %v280, 0
        %v295 = vsel %vm290, %v281, 0
        %v298 = vsel %vm290, %v282, 0
        %v301 = vsel %vm290, %v283, 0
        %303 = vmatpush.msra.mxu0 0.0
        %304 = vmatpush.msra.mxu0 0.0
        %305 = vmatpush.msra.mxu0 0.0
        %306 = vmatpush.msra.mxu0 0.0
        %307 = vmatpush.msra.mxu0 0.0
        %308 = vmatpush.msra.mxu0 0.0
        %309 = vmatpush.msra.mxu0 0.0
        %310 = vmatpush.msra.mxu0 0.0
        %311 = vmatpush.msra.mxu0 0.0
        %312 = vmatpush.msra.mxu0 0.0
        %313 = vmatpush.msra.mxu0 0.0
        %314 = vmatpush.msra.mxu0 0.0
        %315 = vmatpush.msra.mxu0 0.0
        %316 = vmatpush.msra.mxu0 0.0
        %317 = vmatpush.msra.mxu0 %v285
        %318 = vmatpush.msra.mxu0 %v284
        %319 = vmatmul.f32.gmra.mxu0 %v292
        %v320 = vpop.f32.mrf.mxu0
        %v321 = vadd.f32 %v288, %v320
        %322 = vmatmul.f32.gmra.mxu0 %v295
        %v323 = vpop.f32.mrf.mxu0
        %v324 = vadd.f32 %v288, %v323
        %325 = vmatmul.f32.gmra.mxu0 %v298
        %v326 = vpop.f32.mrf.mxu0
        %v327 = vadd.f32 %v288, %v326
        %328 = vmatmul.f32.gmra.mxu0 %v301
        %v329 = vpop.f32.mrf.mxu0
        %v330 = vadd.f32 %v288, %v329
        %331 = vdwg.mxu0
        %v332 = vmax.f32 %v321, 0.0
        %v333 = vmax.f32 %v324, 0.0
        %v334 = vmax.f32 %v327, 0.0
        %v335 = vmax.f32 %v330, 0.0
        %v336 = vld [vmem:[%s3] sm:$0xff]
        %v337 = vld [vmem:[%s3 + $0x8] sm:$0xff]
        %v338 = vld [vmem:[%s3 + $0x10] sm:$0xff]
        %v339 = vld [vmem:[%s3 + $0x18] sm:$0xff]
        %v340 = vld [vmem:[%s4] sm:$0x1]
        %v342 = vperm.slane %v340, 0
        %vm344 = vcmask 261120
        %v346 = vsel %vm344, %v332, 0
        %v349 = vsel %vm344, %v333, 0
        %v352 = vsel %vm344, %v334, 0
        %v355 = vsel %vm344, %v335, 0
        %357 = vmatpush.msra.mxu0 0.0
        %358 = vmatpush.msra.mxu0 0.0
        %359 = vmatpush.msra.mxu0 0.0
        %360 = vmatpush.msra.mxu0 0.0
        %361 = vmatpush.msra.mxu0 0.0
        %362 = vmatpush.msra.mxu0 0.0
        %363 = vmatpush.msra.mxu0 0.0
        %364 = vmatpush.msra.mxu0 0.0
        %365 = vmatpush.msra.mxu0 0.0
        %366 = vmatpush.msra.mxu0 0.0
        %367 = vmatpush.msra.mxu0 0.0
        %368 = vmatpush.msra.mxu0 0.0
        %369 = vmatpush.msra.mxu0 %v339
        %370 = vmatpush.msra.mxu0 %v338
        %371 = vmatpush.msra.mxu0 %v337
        %372 = vmatpush.msra.mxu0 %v336
        %373 = vmatmul.f32.gmra.mxu0 %v346
        %v374 = vpop.f32.mrf.mxu0
        %v375 = vadd.f32 %v342, %v374
        %376 = vmatmul.f32.gmra.mxu0 %v349
        %v377 = vpop.f32.mrf.mxu0
        %v378 = vadd.f32 %v342, %v377
        %379 = vmatmul.f32.gmra.mxu0 %v352
        %v380 = vpop.f32.mrf.mxu0
        %v381 = vadd.f32 %v342, %v380
        %382 = vmatmul.f32.gmra.mxu0 %v355
        %v383 = vpop.f32.mrf.mxu0
        %v384 = vadd.f32 %v342, %v383
        %385 = vdwg.mxu0
        %v386 = vmax.f32 %v375, 0.0
        %v387 = vmax.f32 %v378, 0.0
        %v388 = vmax.f32 %v381, 0.0
        %v389 = vmax.f32 %v384, 0.0
        %v390 = vld [vmem:[%s5] sm:$0xff]
        %v391 = vld [vmem:[%s5 + $0x8] sm:$0xff]
        %v392 = vld [vmem:[%s5 + $0x10] sm:$0xff]
        %v393 = vld [vmem:[%s5 + $0x18] sm:$0xff]
        %v394 = vld [vmem:[%s6] sm:$0x1]
        %v396 = vperm.slane %v394, 0
        %v399 = vsel %vm344, %v386, 0
        %v402 = vsel %vm344, %v387, 0
        %v405 = vsel %vm344, %v388, 0
        %v408 = vsel %vm344, %v389, 0
        %410 = vmatpush.msra.mxu0 0.0
        %411 = vmatpush.msra.mxu0 0.0
        %412 = vmatpush.msra.mxu0 0.0
        %413 = vmatpush.msra.mxu0 0.0
        %414 = vmatpush.msra.mxu0 0.0
        %415 = vmatpush.msra.mxu0 0.0
        %416 = vmatpush.msra.mxu0 0.0
        %417 = vmatpush.msra.mxu0 0.0
        %418 = vmatpush.msra.mxu0 0.0
        %419 = vmatpush.msra.mxu0 0.0
        %420 = vmatpush.msra.mxu0 0.0
        %421 = vmatpush.msra.mxu0 0.0
        %422 = vmatpush.msra.mxu0 %v393
        %423 = vmatpush.msra.mxu0 %v392
        %424 = vmatpush.msra.mxu0 %v391
        %425 = vmatpush.msra.mxu0 %v390
        %426 = vmatmul.f32.gmra.mxu0 %v399
        %v427 = vpop.f32.mrf.mxu0
        %v428 = vadd.f32 %v396, %v427
        %429 = vmatmul.f32.gmra.mxu0 %v402
        %v430 = vpop.f32.mrf.mxu0
        %v431 = vadd.f32 %v396, %v430
        %432 = vmatmul.f32.gmra.mxu0 %v405
        %v433 = vpop.f32.mrf.mxu0
        %v434 = vadd.f32 %v396, %v433
        %435 = vmatmul.f32.gmra.mxu0 %v408
        %v436 = vpop.f32.mrf.mxu0
        %v437 = vadd.f32 %v396, %v436
        %438 = vdwg.mxu0
        %v439 = vtanh.pop %v428
        %v440 = vtanh.pop %v431
        %v441 = vtanh.pop %v434
        %v442 = vtanh.pop %v437
        %v443 = vmul.f32 %v439, 2.0
        %v444 = vmul.f32 %v440, 2.0
        %v445 = vmul.f32 %v441, 2.0
        %v446 = vmul.f32 %v442, 2.0
        %447 = vst [vmem:[%s272] sm:$0xff] %v443
        %448 = vst [vmem:[%s272 + $0x8] sm:$0xff] %v444
        %449 = vst [vmem:[%s272 + $0x10] sm:$0xff] %v445
        %450 = vst [vmem:[%s272 + $0x18] sm:$0xff] %v446
        %s451 = sand.u32 %s181, 1
        %s452 = scalar_lea.sflag [#allocation3], %s451
        %s453 = sand.u32 %s181, 1
        %s454 = smul.addr %s453, 32
        %s455 = scalar_lea.vmem [#allocation2], %s454
        // Predicated region
        $region49: #{tpu_custom_call.1} parent=47 // pred_check
          %p456 = pneg %p191
        $region50: #{tpu_custom_call.1} parent=47 // pred_check_branch
          %458 = sbr.rel (%p456) target = $region52
        $region51: #{tpu_custom_call.1} parent=47 // pred_region
          %s459 = smul.u32 4, %s21
          %461 = vsyncadd %s452, 0
          %s462 = smul.addr %s459, 8
          %s463 = scalar_lea.hbm %s7, %s462
          %s464 = sshll.u32 %s455, 4
          %s465 = int_to_ptr.vmem [resolvable:$true] %s464
          %s466 = sshll.u32 %s463, 4
          %s467 = int_to_ptr.hbm [resolvable:$true] %s466
          %472 = dma.vmem_to_hbm [thread:$0]  %s465, 512, %s467, %s452, 128, 128, 8
        $region52: #{tpu_custom_call.1} parent=47 // pred_fallthru
          _
      $region48: #{tpu_custom_call.1} parent=5 // pred_fallthru
        _
      %p473 = scmp.le.s32.totalorder 2, %s16
      // Predicated region
      $region53: #{tpu_custom_call.1} parent=5 // pred_check
        %p474 = pneg %p473
      $region54: #{tpu_custom_call.1} parent=5 // pred_check_branch
        %476 = sbr.rel (%p474) target = $region56
      $region55: #{tpu_custom_call.1} parent=5 // pred_region
        %s477 = ssub.s32 %s16, 2
        // Predicated region
        $region57: #{tpu_custom_call.1} parent=55 // pred_check
          %p478 = pneg %p197
        $region58: #{tpu_custom_call.1} parent=55 // pred_check_branch
          %480 = sbr.rel (%p478) target = $region60
        $region59: #{tpu_custom_call.1} parent=55 // pred_region
          %s481 = sand.u32 %s182, 1
          %s482 = scalar_lea.sflag [#allocation3], %s481
          %s483 = sand.u32 %s182, 1
          %s484 = smul.addr %s483, 32
          %s485 = scalar_lea.vmem [#allocation2], %s484
          %487 = dma.done %s482, 512
        $region60: #{tpu_custom_call.1} parent=55 // pred_fallthru
          _
      $region56: #{tpu_custom_call.1} parent=5 // pred_fallthru
        _
    $region6: #{tpu_custom_call.1} parent=1 // loop_footer
      %s20 = sadd.s32 1, %s16
    $region7: #{tpu_custom_call.1} parent=1 // loop_footer_branch
      %15 = sbr.rel target = $region3
    $region8: #{tpu_custom_call.1} parent=1 // loop_exit
      _
    %488 = vsyncpa [#allocation3], 1
    %s489 = scalar_lea.sflag [#allocation3], 1
    %490 = vsyncpa %s489, 1

</llo_original>
